<compile_context>
chip_gen: v7x
topology: tpu7x:2x2x1
jax: 0.10.0
libtpu: 0.0.40
codegen_flags: <defaults>
</compile_context>

<pallas_src>
import functools

import jax
import jax.numpy as jnp
from jax.experimental import pallas as pl
from jax.experimental.pallas import tpu as pltpu


def _round_up(x, m):
    return ((x + m - 1) // m) * m


def _make_kernel(with_logits):
    def kernel(x_ref, w_ref, b_ref, v_ref, *out_refs):
        # x_ref: [tile, H]   input feature tile
        # w_ref: [H, A]      linear weight, transposed (resident across grid steps)
        # b_ref: [1, A]      bias
        # v_ref: [1, A]      support values (torch.linspace(vmin, vmax, num_atoms))
        if with_logits:
            logits_ref, probs_ref, mean_ref = out_refs
        else:
            probs_ref, mean_ref = out_refs

        # Linear layer on the MXU with f32 accumulation, + bias.
        logits = jnp.dot(x_ref[...], w_ref[...],
                         preferred_element_type=jnp.float32) + b_ref[...]

        # Numerically stable softmax over the atom axis.  The denominator is
        # inverted exactly (one divide per row) -- the previous approximate EUP
        # reciprocal was not accurate enough for the probability outputs.
        m = jnp.max(logits, axis=-1, keepdims=True)
        e = jnp.exp(logits - m)
        denom = jnp.sum(e, axis=-1, keepdims=True)
        probs = e * (1.0 / denom)

        # Distribution mean: VPU multiply + lane reduction on data already in
        # vregs (no large XLU transpose of the [tile, A] probs tile).
        mean = jnp.sum(probs * v_ref[...], axis=-1, keepdims=True)   # [tile, 1]

        if with_logits:
            logits_ref[...] = logits.astype(logits_ref.dtype)
        probs_ref[...] = probs.astype(probs_ref.dtype)
        mean_ref[...] = mean.astype(mean_ref.dtype)

    return kernel


@functools.partial(
    jax.jit,
    static_argnames=("block_b", "return_logits", "matmul_bf16", "out_dtype"))
def distributional_value_head(inputs, weight_t, bias, values, *,
                              block_b=1024, return_logits=True,
                              matmul_bf16=False, out_dtype=jnp.float32):
    """Pallas forward of DistributionalValueHead.

    inputs:   [B, H] float32
    weight_t: [H, A] float32  (nn.Linear weight, transposed)
    bias:     [A]    float32
    values:   [A]    float32  (torch.linspace(vmin, vmax, num_atoms))

    Returns (logits [B, A] or None, probabilities [B, A], mean [B]).
    """
    B, H = inputs.shape
    A = weight_t.shape[1]

    if matmul_bf16:
        # Cast in the wrapper so the kernel DMAs half the bytes from HBM and the
        # VMEM footprint of the x / weight tiles is halved (accumulation stays f32).
        inputs = inputs.astype(jnp.bfloat16)
        weight_t = weight_t.astype(jnp.bfloat16)
    in_bytes = jnp.dtype(inputs.dtype).itemsize
    out_bytes = jnp.dtype(out_dtype).itemsize

    bias2d = bias.reshape(1, A).astype(jnp.float32)
    values2d = values.reshape(1, A).astype(jnp.float32)

    # --- Batch-tile sizing from an explicit VMEM budget (v7x physical = 64 MiB).
    # Double-buffered per-step bytes (inputs + tensor outputs + mean) per batch row,
    # plus the resident weight / bias / values buffers.
    n_atom_outs = 2 if return_logits else 1
    per_row = 2 * H * in_bytes + 2 * A * out_bytes * n_atom_outs + 2 * 4
    fixed = 2 * H * A * in_bytes + 2 * 2 * A * 4
    # (pipeline_mode=pl.Buffered(1) on the constant-index weight spec would halve
    #  `fixed`; left out here to keep the lowering path maximally portable.)
    budget = 20 * 1024 * 1024
    tile_cap = max(8, (budget - fixed) // per_row) if budget > fixed else 8
    tile = min(block_b, _round_up(B, 8), tile_cap)
    tile = max(8, (tile // 8) * 8)
    num_blocks = pl.cdiv(B, tile)

    vmem_need = fixed + tile * per_row
    vmem_limit = int(min(max(2 * vmem_need, 32 * 1024 * 1024), 48 * 1024 * 1024))

    out_shapes = []
    out_specs = []
    if return_logits:
        out_shapes.append(jax.ShapeDtypeStruct((B, A), out_dtype))
        out_specs.append(pl.BlockSpec((tile, A), lambda i: (i, 0)))
    out_shapes.append(jax.ShapeDtypeStruct((B, A), out_dtype))
    out_specs.append(pl.BlockSpec((tile, A), lambda i: (i, 0)))
    out_shapes.append(jax.ShapeDtypeStruct((B, 1), jnp.float32))
    out_specs.append(pl.BlockSpec((tile, 1), lambda i: (i, 0)))

    outs = pl.pallas_call(
        _make_kernel(return_logits),
        out_shape=tuple(out_shapes),
        grid_spec=pltpu.PrefetchScalarGridSpec(
            num_scalar_prefetch=0,
            grid=(num_blocks,),
            in_specs=[
                pl.BlockSpec((tile, H), lambda i: (i, 0)),
                # Constant index_maps: fetched once, resident across grid steps.
                pl.BlockSpec((H, A), lambda i: (0, 0)),
                pl.BlockSpec((1, A), lambda i: (0, 0)),
                pl.BlockSpec((1, A), lambda i: (0, 0)),
            ],
            out_specs=tuple(out_specs),
        ),
        compiler_params=pltpu.CompilerParams(
            dimension_semantics=("parallel",),
            vmem_limit_bytes=vmem_limit),
    )(inputs, weight_t, bias2d, values2d)

    if return_logits:
        logits, probs, mean = outs
    else:
        probs, mean = outs
        logits = None
    return logits, probs, mean.reshape(B)


def reference(inputs, weight_t, bias, values):
    logits = inputs @ weight_t + bias
    probs = jax.nn.softmax(logits, axis=-1)
    mean = jnp.sum(probs * values, axis=-1)
    return logits, probs, mean


if __name__ == "__main__":
    # Module config (matches DistributionalValueHead(vmin, vmax, num_atoms)).
    vmin, vmax, num_atoms = -10.0, 10.0, 51
    input_size = 32          # hidden size fed into initialize()
    batch = 16

    key = jax.random.PRNGKey(0)
    k_x, k_w, k_b = jax.random.split(key, 3)

    inputs = jax.random.normal(k_x, (batch, input_size), dtype=jnp.float32)
    # torch Linear weight is [num_atoms, input_size]; store transposed for the kernel.
    weight = jax.random.normal(k_w, (num_atoms, input_size), dtype=jnp.float32) * 0.1
    weight_t = weight.T
    bias = jax.random.normal(k_b, (num_atoms,), dtype=jnp.float32) * 0.1
    values = jnp.linspace(vmin, vmax, num_atoms, dtype=jnp.float32)

    logits, probs, mean = distributional_value_head(inputs, weight_t, bias, values)
    jax.block_until_ready((logits, probs, mean))

    ref_logits, ref_probs, ref_mean = reference(inputs, weight_t, bias, values)
    assert logits.shape == (batch, num_atoms)
    assert probs.shape == (batch, num_atoms)
    assert mean.shape == (batch,)
    assert jnp.allclose(logits, ref_logits, atol=1e-4, rtol=1e-4)
    assert jnp.allclose(probs, ref_probs, atol=1e-4, rtol=1e-3)
    assert jnp.allclose(mean, ref_mean, atol=1e-3, rtol=1e-3)
    assert jnp.allclose(jnp.sum(probs, axis=-1), 1.0, atol=1e-5)

    # Reduced-HBM-traffic variant: no logits write-back.
    _, probs2, mean2 = distributional_value_head(
        inputs, weight_t, bias, values, return_logits=False)
    jax.block_until_ready((probs2, mean2))
    assert jnp.allclose(probs2, ref_probs, atol=1e-4, rtol=1e-3)
    assert jnp.allclose(mean2, ref_mean, atol=1e-3, rtol=1e-3)

    # Non-divisible batch exercises the partial-last-block path (no batch padding).
    batch_odd = 13
    inputs_odd = inputs[:batch_odd]
    logits3, probs3, mean3 = distributional_value_head(
        inputs_odd, weight_t, bias, values)
    jax.block_until_ready((logits3, probs3, mean3))
    rl, rp, rm = reference(inputs_odd, weight_t, bias, values)
    assert logits3.shape == (batch_odd, num_atoms)
    assert jnp.allclose(logits3, rl, atol=1e-4, rtol=1e-4)
    assert jnp.allclose(probs3, rp, atol=1e-4, rtol=1e-3)
    assert jnp.allclose(mean3, rm, atol=1e-3, rtol=1e-3)

    # TODO(synk): CategoricalWithSupport.project (categorical projection of target
    # returns) is not part of forward() and is left out of the kernel.

    print("KERNEL_OK")
</pallas_src>

<mosaic_0001>
module attributes {stable_mosaic.version = 11 : i64} {
  func.func @kernel(%arg0: i32, %arg1: memref<16x32xf32, #tpu.memory_space<vmem>>, %arg2: memref<32x51xf32, #tpu.memory_space<vmem>>, %arg3: memref<1x51xf32, #tpu.memory_space<vmem>>, %arg4: memref<1x51xf32, #tpu.memory_space<vmem>>, %arg5: memref<16x51xf32, #tpu.memory_space<vmem>>, %arg6: memref<16x51xf32, #tpu.memory_space<vmem>>, %arg7: memref<16x1xf32, #tpu.memory_space<vmem>>) attributes {dimension_semantics = [#tpu.dimension_semantics<parallel>], iteration_bounds = array<i64: 1>, scalar_prefetch = 0 : i64, scratch_operands = 0 : i64, tpu.core_type = #tpu.core_type<tc>, window_params = [{transform_indices = @transform_0, window_bounds = array<i64: 16, 32>}, {pipeline_mode = #tpu.pipeline_mode<synchronous>, transform_indices = @transform_1, window_bounds = array<i64: 32, 51>}, {pipeline_mode = #tpu.pipeline_mode<synchronous>, transform_indices = @transform_2, window_bounds = array<i64: 1, 51>}, {pipeline_mode = #tpu.pipeline_mode<synchronous>, transform_indices = @transform_3, window_bounds = array<i64: 1, 51>}, {transform_indices = @transform_4, window_bounds = array<i64: 16, 51>}, {transform_indices = @transform_5, window_bounds = array<i64: 16, 51>}, {transform_indices = @transform_6, window_bounds = array<i64: 16, 1>}]} {
    %c0 = arith.constant 0 : index
    %c0_0 = arith.constant 0 : index
    %0 = vector.load %arg1[%c0, %c0_0] : memref<16x32xf32, #tpu.memory_space<vmem>>, vector<16x32xf32>
    %c0_1 = arith.constant 0 : index
    %c0_2 = arith.constant 0 : index
    %1 = vector.load %arg2[%c0_1, %c0_2] : memref<32x51xf32, #tpu.memory_space<vmem>>, vector<32x51xf32>
    %cst = arith.constant dense<0.000000e+00> : vector<16x51xf32>
    %2 = tpu.matmul %0, %1, %cst {dimension_numbers = #tpu.dot_dimension_numbers<[1], [0], [0], [1], [0, 0, 1, 1], [], []>} : vector<16x32xf32>, vector<32x51xf32>, vector<16x51xf32> -> vector<16x51xf32>
    %c0_3 = arith.constant 0 : index
    %c0_4 = arith.constant 0 : index
    %3 = vector.load %arg3[%c0_3, %c0_4] : memref<1x51xf32, #tpu.memory_space<vmem>>, vector<1x51xf32>
    %4 = vector.broadcast %3 : vector<1x51xf32> to vector<16x51xf32>
    %5 = arith.addf %2, %4 : vector<16x51xf32>
    %cst_5 = arith.constant dense<0xFF800000> : vector<16xf32>
    %6 = vector.multi_reduction <maximumf>, %5, %cst_5 [1] : vector<16x51xf32> to vector<16xf32>
    %7 = vector.shape_cast %6 : vector<16xf32> to vector<16x1xf32>
    %8 = vector.broadcast %7 : vector<16x1xf32> to vector<16x51xf32>
    %9 = arith.subf %5, %8 : vector<16x51xf32>
    %10 = math.exp %9 : vector<16x51xf32>
    %cst_6 = arith.constant dense<0.000000e+00> : vector<16xf32>
    %11 = vector.multi_reduction <add>, %10, %cst_6 [1] : vector<16x51xf32> to vector<16xf32>
    %12 = vector.shape_cast %11 : vector<16xf32> to vector<16x1xf32>
    %cst_7 = arith.constant 1.000000e+00 : f32
    %13 = vector.broadcast %cst_7 : f32 to vector<16x1xf32>
    %14 = arith.divf %13, %12 : vector<16x1xf32>
    %15 = vector.broadcast %14 : vector<16x1xf32> to vector<16x51xf32>
    %16 = arith.mulf %10, %15 : vector<16x51xf32>
    %c0_8 = arith.constant 0 : index
    %c0_9 = arith.constant 0 : index
    %17 = vector.load %arg4[%c0_8, %c0_9] : memref<1x51xf32, #tpu.memory_space<vmem>>, vector<1x51xf32>
    %18 = vector.broadcast %17 : vector<1x51xf32> to vector<16x51xf32>
    %19 = arith.mulf %16, %18 : vector<16x51xf32>
    %cst_10 = arith.constant dense<0.000000e+00> : vector<16xf32>
    %20 = vector.multi_reduction <add>, %19, %cst_10 [1] : vector<16x51xf32> to vector<16xf32>
    %21 = vector.shape_cast %20 : vector<16xf32> to vector<16x1xf32>
    %c0_11 = arith.constant 0 : index
    %c0_12 = arith.constant 0 : index
    %22 = vector.load %arg5[%c0_11, %c0_12] : memref<16x51xf32, #tpu.memory_space<vmem>>, vector<16x51xf32>
    tpu.vector_store %arg5[%c0_11, %c0_12], %5 {strides = array<i32>} : memref<16x51xf32, #tpu.memory_space<vmem>>, vector<16x51xf32>,
    %c0_13 = arith.constant 0 : index
    %c0_14 = arith.constant 0 : index
    %23 = vector.load %arg6[%c0_13, %c0_14] : memref<16x51xf32, #tpu.memory_space<vmem>>, vector<16x51xf32>
    tpu.vector_store %arg6[%c0_13, %c0_14], %16 {strides = array<i32>} : memref<16x51xf32, #tpu.memory_space<vmem>>, vector<16x51xf32>,
    %c0_15 = arith.constant 0 : index
    %c0_16 = arith.constant 0 : index
    %24 = vector.load %arg7[%c0_15, %c0_16] : memref<16x1xf32, #tpu.memory_space<vmem>>, vector<16x1xf32>
    tpu.vector_store %arg7[%c0_15, %c0_16], %21 {strides = array<i32>} : memref<16x1xf32, #tpu.memory_space<vmem>>, vector<16x1xf32>,
    return
  }
  func.func @transform_0(%arg0: i32) -> (i32, i32) {
    %c0_i32 = arith.constant 0 : i32
    %c0_i32_0 = arith.constant 0 : i32
    return %arg0, %c0_i32 : i32, i32
  }
  func.func @transform_1(%arg0: i32) -> (i32, i32) {
    %c0_i32 = arith.constant 0 : i32
    %c0_i32_0 = arith.constant 0 : i32
    %c0_i32_1 = arith.constant 0 : i32
    return %c0_i32, %c0_i32_0 : i32, i32
  }
  func.func @transform_2(%arg0: i32) -> (i32, i32) {
    %c0_i32 = arith.constant 0 : i32
    %c0_i32_0 = arith.constant 0 : i32
    %c0_i32_1 = arith.constant 0 : i32
    return %c0_i32, %c0_i32_0 : i32, i32
  }
  func.func @transform_3(%arg0: i32) -> (i32, i32) {
    %c0_i32 = arith.constant 0 : i32
    %c0_i32_0 = arith.constant 0 : i32
    %c0_i32_1 = arith.constant 0 : i32
    return %c0_i32, %c0_i32_0 : i32, i32
  }
  func.func @transform_4(%arg0: i32) -> (i32, i32) {
    %c0_i32 = arith.constant 0 : i32
    %c0_i32_0 = arith.constant 0 : i32
    return %arg0, %c0_i32 : i32, i32
  }
  func.func @transform_5(%arg0: i32) -> (i32, i32) {
    %c0_i32 = arith.constant 0 : i32
    %c0_i32_0 = arith.constant 0 : i32
    return %arg0, %c0_i32 : i32, i32
  }
  func.func @transform_6(%arg0: i32) -> (i32, i32) {
    %c0_i32 = arith.constant 0 : i32
    %c0_i32_0 = arith.constant 0 : i32
    return %arg0, %c0_i32 : i32, i32
  }
}

</mosaic_0001>

<llo_original>
// kernel: distributional_value_head.1
$region0: #{distributional_value_head.1}
  #allocation0 [shape = 'u32[]', space=smem, size = 0x4, offset = 0x4, fixed_abs, tag = 'smem constant byte address 0x4 - core index']
  #allocation1 [shape = 'u32[144,128]{1,0:T(1,128)}', space=vmem, size = 0x12000, scoped, tag = 'internal scratch']
  %s0 = inlined_call_operand.hbm [shape: f32[16,32], index: 0, kind: input, shape index: {}]
  %s1 = inlined_call_operand.hbm [shape: f32[32,51], index: 1, kind: input, shape index: {}]
  %s2 = inlined_call_operand.vmem [shape: f32[1,51], index: 2, kind: input, shape index: {}]
  %s3 = inlined_call_operand.vmem [shape: f32[1,51], index: 3, kind: input, shape index: {}]
  %s4 = inlined_call_operand.hbm [shape: f32[16,51], index: 4, kind: output, shape index: {0}]
  %s5 = inlined_call_operand.hbm [shape: f32[16,51], index: 5, kind: output, shape index: {1}]
  %s6 = inlined_call_operand.vmem [shape: f32[16,1], index: 6, kind: output, shape index: {2}]
  %7 = xla_tuple %s4, %s5, %s6
  %s8 = sld [smem:[#allocation0]]
  $region50: #{distributional_value_head.1} parent=0
    _
  %s10 = ssub.s32 1, %s8
  %s11 = scalar_select 0, %s10, %s8
  $region1: #{distributional_value_head.1} parent=0
    #allocation2 [shape = 'u8[8192]{0}', space=vmem, size = 0x2000, scoped, tag = 'input window, operand 0, single buffered']
    #allocation3 [shape = 's32[1]{0}', space=sflag, size = 0x4, scoped, tag = 'scoped memory for distributional_value_head.1']
    #allocation4 [shape = 's32[1]{0}', space=sflag, size = 0x4, scoped, tag = 'scoped memory for distributional_value_head.1']
    #allocation5 [shape = 'u8[16384]{0}', space=vmem, size = 0x4000, scoped, tag = 'input window, operand 1, single buffered']
    #allocation6 [shape = 's32[1]{0}', space=sflag, size = 0x4, scoped, tag = 'scoped memory for distributional_value_head.1']
    #allocation7 [shape = 'u8[8192]{0}', space=vmem, size = 0x2000, scoped, tag = 'output window, operand 0, single buffered']
    #allocation8 [shape = 'u8[8192]{0}', space=vmem, size = 0x2000, scoped, tag = 'output window, operand 1, single buffered']
    #allocation9 [shape = 's32[1]{0}', space=sflag, size = 0x4, scoped, tag = 'scoped memory for distributional_value_head.1']
    %12 = vsyncpa [#allocation3], 0
    %13 = vsyncpa [#allocation6], 0
    %14 = vsyncpa [#allocation4], 0
    %15 = vsyncpa [#allocation9], 0
    // Predicated region
    $region2: #{distributional_value_head.1} parent=1 // pred_check
      _
    $region3: #{distributional_value_head.1} parent=1 // pred_check_branch
      %17 = sbr.rel (0) target = $region5
    $region4: #{distributional_value_head.1} parent=1 // pred_region
      %s19 = ssub.s32 256, 256
      %20 = vsyncadd [#allocation3], %s19
      %s21 = sshll.u32 [#allocation2], 4
      %s22 = int_to_ptr.vmem [resolvable:$true] %s21
      %27 = dma.hbm_to_vmem [thread:$0]  %s0, 256, %s22, [#allocation3], 128, 128, 8
    $region5: #{distributional_value_head.1} parent=1 // pred_fallthru
      _
    // Predicated region
    $region6: #{distributional_value_head.1} parent=1 // pred_check
      _
    $region7: #{distributional_value_head.1} parent=1 // pred_check_branch
      %29 = sbr.rel (0) target = $region9
    $region8: #{distributional_value_head.1} parent=1 // pred_region
      %s31 = ssub.s32 512, 512
      %32 = vsyncadd [#allocation6], %s31
      %s33 = sshll.u32 [#allocation5], 4
      %s34 = int_to_ptr.vmem [resolvable:$true] %s33
      %39 = dma.hbm_to_vmem [thread:$0]  %s1, 512, %s34, [#allocation6], 128, 128, 8
    $region9: #{distributional_value_head.1} parent=1 // pred_fallthru
      _
    // Predicated region
    $region10: #{distributional_value_head.1} parent=1 // pred_check
      _
    $region11: #{distributional_value_head.1} parent=1 // pred_check_branch
      %41 = sbr.rel (0) target = $region13
    $region12: #{distributional_value_head.1} parent=1 // pred_region
      _
    $region13: #{distributional_value_head.1} parent=1 // pred_fallthru
      _
    // Predicated region
    $region14: #{distributional_value_head.1} parent=1 // pred_check
      _
    $region15: #{distributional_value_head.1} parent=1 // pred_check_branch
      %43 = sbr.rel (0) target = $region17
    $region16: #{distributional_value_head.1} parent=1 // pred_region
      _
    $region17: #{distributional_value_head.1} parent=1 // pred_fallthru
      _
    // Predicated region
    $region18: #{distributional_value_head.1} parent=1 // pred_check
      _
    $region19: #{distributional_value_head.1} parent=1 // pred_check_branch
      %45 = sbr.rel (0) target = $region21
    $region20: #{distributional_value_head.1} parent=1 // pred_region
      %46 = dma.done [#allocation3], 256
    $region21: #{distributional_value_head.1} parent=1 // pred_fallthru
      _
    // Predicated region
    $region22: #{distributional_value_head.1} parent=1 // pred_check
      _
    $region23: #{distributional_value_head.1} parent=1 // pred_check_branch
      %48 = sbr.rel (0) target = $region25
    $region24: #{distributional_value_head.1} parent=1 // pred_region
      %49 = dma.done [#allocation6], 512
    $region25: #{distributional_value_head.1} parent=1 // pred_fallthru
      _
    %v50 = vld [vmem:[#allocation2] sm:$0xff]
    %v51 = vld [vmem:[#allocation2 + $0x8] sm:$0xff]
    %v52 = vld [vmem:[#allocation5] sm:$0xff]
    %v53 = vld [vmem:[#allocation5 + $0x8] sm:$0xff]
    %v54 = vld [vmem:[#allocation5 + $0x10] sm:$0xff]
    %v55 = vld [vmem:[#allocation5 + $0x18] sm:$0xff]
    %v56 = vld [vmem:[%s2] sm:$0x1]
    %v58 = vlaneseq
    %v59 = vshrl.u32 %v58, 7
    %v60 = vsub.s32 0, %v59
    %v61 = vrot.slane %v56, %v60
    %vm63 = vcmask 261120
    %v65 = vsel %vm63, %v50, 0
    %v68 = vsel %vm63, %v51, 0
    %70 = vmatprep.subr.mxu0 0.0
    %71 = vmatpush1.msra.mxu0 %v52
    %72 = vmatprep.subr.mxu0 0.0
    %73 = vmatpush1.msra.mxu0 %v53
    %74 = vmatprep.subr.mxu0 0.0
    %75 = vmatpush1.msra.mxu0 %v54
    %76 = vmatprep.subr.mxu0 0.0
    %77 = vmatpush1.msra.mxu0 %v55
    %78 = vmatprep.subr.mxu0 0.0
    %79 = vmatpush1.msra.mxu0 0.0
    %80 = vmatprep.subr.mxu0 0.0
    %81 = vmatpush1.msra.mxu0 0.0
    %82 = vmatprep.subr.mxu0 0.0
    %83 = vmatpush1.msra.mxu0 0.0
    %84 = vmatprep.subr.mxu0 0.0
    %85 = vmatpush1.msra.mxu0 0.0
    %86 = vmatprep.subr.mxu0 0.0
    %87 = vmatpush1.msra.mxu0 0.0
    %88 = vmatprep.subr.mxu0 0.0
    %89 = vmatpush1.msra.mxu0 0.0
    %90 = vmatprep.subr.mxu0 0.0
    %91 = vmatpush1.msra.mxu0 0.0
    %92 = vmatprep.subr.mxu0 0.0
    %93 = vmatpush1.msra.mxu0 0.0
    %94 = vmatprep.subr.mxu0 0.0
    %95 = vmatpush1.msra.mxu0 0.0
    %96 = vmatprep.subr.mxu0 0.0
    %97 = vmatpush1.msra.mxu0 0.0
    %98 = vmatprep.subr.mxu0 0.0
    %99 = vmatpush1.msra.mxu0 0.0
    %100 = vmatprep.subr.mxu0 0.0
    %101 = vmatpush1.msra.mxu0 0.0
    %102 = vmatprep.subr.mxu0 0.0
    %103 = vmatpush1.msra.mxu0 0.0
    %104 = vmatprep.subr.mxu0 0.0
    %105 = vmatpush1.msra.mxu0 0.0
    %106 = vmatprep.subr.mxu0 0.0
    %107 = vmatpush1.msra.mxu0 0.0
    %108 = vmatprep.subr.mxu0 0.0
    %109 = vmatpush1.msra.mxu0 0.0
    %110 = vmatprep.subr.mxu0 0.0
    %111 = vmatpush1.msra.mxu0 0.0
    %112 = vmatprep.subr.mxu0 0.0
    %113 = vmatpush1.msra.mxu0 0.0
    %114 = vmatprep.subr.mxu0 0.0
    %115 = vmatpush1.msra.mxu0 0.0
    %116 = vmatprep.subr.mxu0 0.0
    %117 = vmatpush1.msra.mxu0 0.0
    %118 = vmatprep.subr.mxu0 0.0
    %119 = vmatpush1.msra.mxu0 0.0
    %120 = vmatprep.subr.mxu0 0.0
    %121 = vmatpush1.msra.mxu0 0.0
    %122 = vmatprep.subr.mxu0 0.0
    %123 = vmatpush1.msra.mxu0 0.0
    %124 = vmatprep.subr.mxu0 0.0
    %125 = vmatpush1.msra.mxu0 0.0
    %126 = vmatprep.subr.mxu0 0.0
    %127 = vmatpush1.msra.mxu0 0.0
    %128 = vmatprep.subr.mxu0 0.0
    %129 = vmatpush1.msra.mxu0 0.0
    %130 = vmatprep.subr.mxu0 0.0
    %131 = vmatpush1.msra.mxu0 0.0
    %132 = vmatprep.subr.mxu0 0.0
    %133 = vmatpush1.msra.mxu0 0.0
    %134 = vmatprep.mubr.f32.mxu0 0.0
    %135 = vmatmul.mubr.f32.gmra.mrb[0].mxu0 %v65
    %v136 = vpop.f32.mrb[0].mxu0
    %v137 = vadd.f32 %v61, %v136
    %v138 = vpop.f32.mrb[0].mxu0
    %139 = vmatprep.mubr.f32.mxu0 0.0
    %140 = vmatmul.mubr.f32.gmra.mrb[0].mxu0 %v68
    %v141 = vpop.f32.mrb[0].mxu0
    %v142 = vadd.f32 %v61, %v141
    %v143 = vpop.f32.mrb[0].mxu0
    %144 = vdwg.mxu0
    %vm145 = vcmask 416768
    %v146 = vsel %vm145, %v137, -inf
    %147 = vmax.xlane.f32.xlu0 %v146
    %v148 = vpop.xlane.xlu0 %147
    %v149 = vsel %vm145, %v142, -inf
    %150 = vmax.xlane.f32.xlu0 %v149
    %v151 = vpop.xlane.xlu0 %150
    %v152 = vsub.f32 %v137, %v148
    %v153 = vsub.f32 %v142, %v151
    %v154 = vmul.f32 %v152, 1.442695
    %v155 = vpow.pop %v154
    %v156 = vmul.f32 %v153, 1.442695
    %v157 = vpow.pop %v156
    %v158 = vsel %vm145, %v155, 0.0
    %159 = vadd.xlane.f32.xlu0 %v158
    %v160 = vpop.xlane.xlu0 %159
    %v161 = vsel %vm145, %v157, 0.0
    %162 = vadd.xlane.f32.xlu0 %v161
    %v163 = vpop.xlane.xlu0 %162
    %v164 = vrcp.pop %v160
    %v165 = vmul.f32 1.0, %v164
    %v166 = vrcp.pop %v163
    %v167 = vmul.f32 1.0, %v166
    %v168 = vmul.f32 %v155, %v165
    %v169 = vmul.f32 %v157, %v167
    %v170 = vld [vmem:[%s3] sm:$0x1]
    %v172 = vlaneseq
    %v173 = vshrl.u32 %v172, 7
    %v174 = vsub.s32 0, %v173
    %v175 = vrot.slane %v170, %v174
    %v177 = vmul.f32 %v168, %v175
    %v178 = vmul.f32 %v169, %v175
    %v179 = vsel %vm145, %v177, 0.0
    %180 = vadd.xlane.f32.xlu0 %v179
    %v181 = vpop.xlane.xlu0 %180
    %v182 = vsel %vm145, %v178, 0.0
    %183 = vadd.xlane.f32.xlu0 %v182
    %v184 = vpop.xlane.xlu0 %183
    %185 = vst.msk [vmem:[#allocation7] sm:$0xff] %vm145, %v137
    %186 = vst.msk [vmem:[#allocation7 + $0x8] sm:$0xff] %vm145, %v142
    %187 = vst.msk [vmem:[#allocation8] sm:$0xff] %vm145, %v168
    %188 = vst.msk [vmem:[#allocation8 + $0x8] sm:$0xff] %vm145, %v169
    %vm189 = vcmask 7168
    %190 = vst.msk [vmem:[%s6] sm:$0xff] %vm189, %v181
    %191 = vst.msk [vmem:[%s6 + $0x8] sm:$0xff] %vm189, %v184
    // Predicated region
    $region26: #{distributional_value_head.1} parent=1 // pred_check
      _
    $region27: #{distributional_value_head.1} parent=1 // pred_check_branch
      %193 = sbr.rel (0) target = $region29
    $region28: #{distributional_value_head.1} parent=1 // pred_region
      %s195 = ssub.s32 256, 256
      %196 = vsyncadd [#allocation4], %s195
      %s197 = sshll.u32 [#allocation7], 4
      %s198 = int_to_ptr.vmem [resolvable:$true] %s197
      %203 = dma.vmem_to_hbm [thread:$0]  %s198, 256, %s4, [#allocation4], 128, 128, 8
    $region29: #{distributional_value_head.1} parent=1 // pred_fallthru
      _
    // Predicated region
    $region30: #{distributional_value_head.1} parent=1 // pred_check
      _
    $region31: #{distributional_value_head.1} parent=1 // pred_check_branch
      %205 = sbr.rel (0) target = $region33
    $region32: #{distributional_value_head.1} parent=1 // pred_region
      %s207 = ssub.s32 256, 256
      %208 = vsyncadd [#allocation9], %s207
      %s209 = sshll.u32 [#allocation8], 4
      %s210 = int_to_ptr.vmem [resolvable:$true] %s209
      %215 = dma.vmem_to_hbm [thread:$0]  %s210, 256, %s5, [#allocation9], 128, 128, 8
    $region33: #{distributional_value_head.1} parent=1 // pred_fallthru
      _
    // Predicated region
    $region34: #{distributional_value_head.1} parent=1 // pred_check
      _
    $region35: #{distributional_value_head.1} parent=1 // pred_check_branch
      %217 = sbr.rel (0) target = $region37
    $region36: #{distributional_value_head.1} parent=1 // pred_region
      _
    $region37: #{distributional_value_head.1} parent=1 // pred_fallthru
      _
    // Predicated region
    $region38: #{distributional_value_head.1} parent=1 // pred_check
      _
    $region39: #{distributional_value_head.1} parent=1 // pred_check_branch
      %219 = sbr.rel (0) target = $region41
    $region40: #{distributional_value_head.1} parent=1 // pred_region
      %220 = dma.done [#allocation4], 256
    $region41: #{distributional_value_head.1} parent=1 // pred_fallthru
      _
    // Predicated region
    $region42: #{distributional_value_head.1} parent=1 // pred_check
      _
    $region43: #{distributional_value_head.1} parent=1 // pred_check_branch
      %222 = sbr.rel (0) target = $region45
    $region44: #{distributional_value_head.1} parent=1 // pred_region
      %223 = dma.done [#allocation9], 256
    $region45: #{distributional_value_head.1} parent=1 // pred_fallthru
      _
    // Predicated region
    $region46: #{distributional_value_head.1} parent=1 // pred_check
      _
    $region47: #{distributional_value_head.1} parent=1 // pred_check_branch
      %225 = sbr.rel (0) target = $region49
    $region48: #{distributional_value_head.1} parent=1 // pred_region
      _
    $region49: #{distributional_value_head.1} parent=1 // pred_fallthru
      _
    %226 = vsyncpa [#allocation3], 1
    %227 = vsyncpa [#allocation6], 1
    %228 = vsyncpa [#allocation4], 1
    %229 = vsyncpa [#allocation9], 1

</llo_original>
